<compile_context>
chip_gen: v7x
topology: tpu7x:2x2x1
jax: 0.10.0
libtpu: 0.0.40
codegen_flags: <defaults>
</compile_context>

<pallas_src>
import jax
import jax.numpy as jnp
from jax.experimental import pallas as pl
from jax.experimental.pallas import tpu as pltpu

BN_EPS = 1e-5   # PyTorch BatchNorm1d default
LANE = 128      # TPU lane width


def _round_up(n, m):
    return ((n + m - 1) // m) * m


# ----------------------------- fused kernel ----------------------------------

def _make_fused_mlp_kernel(num_hidden):
    """Fused [Linear -> BN(train) -> ReLU] x num_hidden -> Linear -> Sigmoid."""

    def kernel(*refs):
        # refs: x, (w, b, gamma, beta) * num_hidden, w_out, b_out, o
        x_ref = refs[0]
        o_ref = refs[-1]

        h = x_ref[...]                                   # (B, F_in_pad) f32
        idx = 1
        for _ in range(num_hidden):
            w_ref, b_ref, g_ref, be_ref = refs[idx:idx + 4]
            idx += 4
            # Linear (MXU), f32 accumulate.
            y = jnp.dot(h, w_ref[...], preferred_element_type=jnp.float32)
            y = y + b_ref[...]
            # BatchNorm1d (training mode: biased batch var), folded into a
            # single per-feature scale/shift. One pass over y for the stats.
            mean = jnp.mean(y, axis=0, keepdims=True)
            var = jnp.mean(y * y, axis=0, keepdims=True) - mean * mean
            var = jnp.maximum(var, 0.0)                  # guard fp round-off
            scale = g_ref[...] * jax.lax.rsqrt(var + BN_EPS)
            shift = be_ref[...] - mean * scale
            # Fused BN + ReLU.
            h = jnp.maximum(y * scale + shift, 0.0)

        w_ref, b_ref = refs[idx], refs[idx + 1]
        y = jnp.dot(h, w_ref[...], preferred_element_type=jnp.float32)
        y = y + b_ref[...]
        # Sigmoid via EUP exp + approximate EUP reciprocal; clamp to [0,1] to
        # absorb the ~2^-12 relative error of the approximation.
        s = pl.reciprocal(1.0 + jnp.exp(-y), approx=True)
        o_ref[...] = jnp.clip(s, 0.0, 1.0).astype(o_ref.dtype)

    return kernel


# ----------------------------- wrapper ----------------------------------------

def model_forward(x, params, out_features):
    """x: (B, in_feature) f32.  params hold lane-padded (to 128) weights."""
    hidden = params["hidden"]
    w_out, b_out = params["out"]

    # Pad the input feature dim to match the (already padded) first weight.
    fin_pad = hidden[0][0].shape[0] if hidden else w_out.shape[0]
    B, fin = x.shape
    if fin < fin_pad:
        x = jnp.pad(x, ((0, 0), (0, fin_pad - fin)))

    flat_inputs = [x]
    for (w, b, g, be) in hidden:
        flat_inputs += [w, b, g, be]
    flat_inputs += [w_out, b_out]
    n_out_pad = w_out.shape[1]

    vmem_spec = pl.BlockSpec(memory_space=pltpu.MemorySpace.VMEM)
    out_pad = pl.pallas_call(
        _make_fused_mlp_kernel(len(hidden)),
        out_shape=jax.ShapeDtypeStruct((B, n_out_pad), jnp.float32),
        in_specs=[vmem_spec] * len(flat_inputs),
        out_specs=vmem_spec,
    )(*flat_inputs)

    # Drop the lane padding outside the kernel.
    return out_pad[:, :out_features]


# ----------------------------- pure-JAX reference -----------------------------

def reference_forward(x, params, out_features):
    hidden = params["hidden"]
    w_out, b_out = params["out"]
    fin_pad = hidden[0][0].shape[0] if hidden else w_out.shape[0]
    B, fin = x.shape
    h = jnp.pad(x, ((0, 0), (0, fin_pad - fin))) if fin < fin_pad else x
    for (w, b, g, be) in hidden:
        y = h @ w + b
        mean = jnp.mean(y, axis=0, keepdims=True)
        var = jnp.mean((y - mean) ** 2, axis=0, keepdims=True)
        h = jnp.maximum((y - mean) * jax.lax.rsqrt(var + BN_EPS) * g + be, 0.0)
    y = h @ w_out + b_out
    return jax.nn.sigmoid(y)[:, :out_features]


# ----------------------------- param init ------------------------------------

def init_params(key, in_feature, out_features, hidden_num_list):
    """PyTorch-default-style init (U(-1/sqrt(fan_in), 1/sqrt(fan_in)) for W, b;
    gamma=1, beta=0), then zero-padded so every feature dim is a multiple of 128.
    Zero padding is exact: padded input columns / weight rows contribute 0, and
    padded gamma/beta columns keep padded activations at 0 through BN+ReLU."""
    params = {"hidden": [], "out": None}
    fin, fin_pad = in_feature, _round_up(in_feature, LANE)
    for n in hidden_num_list:
        n_pad = _round_up(n, LANE)
        key, kw, kb = jax.random.split(key, 3)
        bound = 1.0 / (fin ** 0.5)
        w = jax.random.uniform(kw, (fin, n), jnp.float32, -bound, bound)
        b = jax.random.uniform(kb, (1, n), jnp.float32, -bound, bound)
        w = jnp.pad(w, ((0, fin_pad - fin), (0, n_pad - n)))
        b = jnp.pad(b, ((0, 0), (0, n_pad - n)))
        gamma = jnp.pad(jnp.ones((1, n), jnp.float32), ((0, 0), (0, n_pad - n)))
        beta = jnp.zeros((1, n_pad), jnp.float32)
        params["hidden"].append((w, b, gamma, beta))
        fin, fin_pad = n, n_pad
    n_out_pad = _round_up(out_features, LANE)
    key, kw, kb = jax.random.split(key, 3)
    bound = 1.0 / (fin ** 0.5)
    w = jax.random.uniform(kw, (fin, out_features), jnp.float32, -bound, bound)
    b = jax.random.uniform(kb, (1, out_features), jnp.float32, -bound, bound)
    w = jnp.pad(w, ((0, fin_pad - fin), (0, n_out_pad - out_features)))
    b = jnp.pad(b, ((0, 0), (0, n_out_pad - out_features)))
    params["out"] = (w, b)
    return params


# ----------------------------- main -------------------------------------------

if __name__ == "__main__":
    B = 8                       # batch not padded: BN stats are over the batch
    in_feature = 32
    hidden_num_list = [64, 48]
    out_features = 16

    key = jax.random.PRNGKey(0)
    key, kx, kp = jax.random.split(key, 3)
    x = jax.random.normal(kx, (B, in_feature), jnp.float32)
    params = init_params(kp, in_feature, out_features, hidden_num_list)

    fwd = jax.jit(lambda xx, pp: model_forward(xx, pp, out_features))
    out = jax.block_until_ready(fwd(x, params))

    ref = reference_forward(x, params, out_features)

    # TODO(synk): BatchNorm running_mean/running_var are not tracked; this
    # reproduces training-mode forward output only (matches nn.BatchNorm1d.train()).
    assert out.shape == (B, out_features)
    assert bool(jnp.all(jnp.isfinite(out)))
    assert bool(jnp.all((out >= 0.0) & (out <= 1.0)))          # sigmoid range
    assert bool(jnp.allclose(out, ref, atol=2e-3, rtol=2e-3))  # matches pure-JAX ref
    print("KERNEL_OK")
</pallas_src>

<mosaic_0001>
module attributes {stable_mosaic.version = 11 : i64} {
  func.func @kernel(%arg0: memref<8x128xf32, #tpu.memory_space<vmem>>, %arg1: memref<128x128xf32, #tpu.memory_space<vmem>>, %arg2: memref<1x128xf32, #tpu.memory_space<vmem>>, %arg3: memref<1x128xf32, #tpu.memory_space<vmem>>, %arg4: memref<1x128xf32, #tpu.memory_space<vmem>>, %arg5: memref<128x128xf32, #tpu.memory_space<vmem>>, %arg6: memref<1x128xf32, #tpu.memory_space<vmem>>, %arg7: memref<1x128xf32, #tpu.memory_space<vmem>>, %arg8: memref<1x128xf32, #tpu.memory_space<vmem>>, %arg9: memref<128x128xf32, #tpu.memory_space<vmem>>, %arg10: memref<1x128xf32, #tpu.memory_space<vmem>>, %arg11: memref<8x128xf32, #tpu.memory_space<vmem>>) attributes {dimension_semantics = [], scalar_prefetch = 0 : i64, scratch_operands = 0 : i64, tpu.core_type = #tpu.core_type<tc>} {
    %c0 = arith.constant 0 : index
    %c0_0 = arith.constant 0 : index
    %0 = vector.load %arg0[%c0, %c0_0] : memref<8x128xf32, #tpu.memory_space<vmem>>, vector<8x128xf32>
    %c0_1 = arith.constant 0 : index
    %c0_2 = arith.constant 0 : index
    %1 = vector.load %arg1[%c0_1, %c0_2] : memref<128x128xf32, #tpu.memory_space<vmem>>, vector<128x128xf32>
    %cst = arith.constant dense<0.000000e+00> : vector<8x128xf32>
    %2 = tpu.matmul %0, %1, %cst {dimension_numbers = #tpu.dot_dimension_numbers<[1], [0], [0], [1], [0, 0, 1, 1], [], []>} : vector<8x128xf32>, vector<128x128xf32>, vector<8x128xf32> -> vector<8x128xf32>
    %c0_3 = arith.constant 0 : index
    %c0_4 = arith.constant 0 : index
    %3 = vector.load %arg2[%c0_3, %c0_4] : memref<1x128xf32, #tpu.memory_space<vmem>>, vector<1x128xf32>
    %4 = vector.broadcast %3 : vector<1x128xf32> to vector<8x128xf32>
    %5 = arith.addf %2, %4 : vector<8x128xf32>
    %cst_5 = arith.constant dense<0.000000e+00> : vector<128xf32>
    %6 = vector.multi_reduction <add>, %5, %cst_5 [0] : vector<8x128xf32> to vector<128xf32>
    %7 = vector.shape_cast %6 : vector<128xf32> to vector<1x128xf32>
    %cst_6 = arith.constant 8.000000e+00 : f32
    %8 = vector.broadcast %cst_6 : f32 to vector<1x128xf32>
    %9 = arith.divf %7, %8 : vector<1x128xf32>
    %10 = arith.mulf %5, %5 : vector<8x128xf32>
    %cst_7 = arith.constant dense<0.000000e+00> : vector<128xf32>
    %11 = vector.multi_reduction <add>, %10, %cst_7 [0] : vector<8x128xf32> to vector<128xf32>
    %12 = vector.shape_cast %11 : vector<128xf32> to vector<1x128xf32>
    %cst_8 = arith.constant 8.000000e+00 : f32
    %13 = vector.broadcast %cst_8 : f32 to vector<1x128xf32>
    %14 = arith.divf %12, %13 : vector<1x128xf32>
    %15 = arith.mulf %9, %9 : vector<1x128xf32>
    %16 = arith.subf %14, %15 : vector<1x128xf32>
    %cst_9 = arith.constant 0.000000e+00 : f32
    %17 = vector.broadcast %cst_9 : f32 to vector<1x128xf32>
    %18 = arith.maximumf %16, %17 : vector<1x128xf32>
    %c0_10 = arith.constant 0 : index
    %c0_11 = arith.constant 0 : index
    %19 = vector.load %arg3[%c0_10, %c0_11] : memref<1x128xf32, #tpu.memory_space<vmem>>, vector<1x128xf32>
    %cst_12 = arith.constant 9.99999974E-6 : f32
    %20 = vector.broadcast %cst_12 : f32 to vector<1x128xf32>
    %21 = arith.addf %18, %20 : vector<1x128xf32>
    %22 = math.rsqrt %21 : vector<1x128xf32>
    %23 = arith.mulf %19, %22 : vector<1x128xf32>
    %c0_13 = arith.constant 0 : index
    %c0_14 = arith.constant 0 : index
    %24 = vector.load %arg4[%c0_13, %c0_14] : memref<1x128xf32, #tpu.memory_space<vmem>>, vector<1x128xf32>
    %25 = arith.mulf %9, %23 : vector<1x128xf32>
    %26 = arith.subf %24, %25 : vector<1x128xf32>
    %27 = vector.broadcast %23 : vector<1x128xf32> to vector<8x128xf32>
    %28 = arith.mulf %5, %27 : vector<8x128xf32>
    %29 = vector.broadcast %26 : vector<1x128xf32> to vector<8x128xf32>
    %30 = arith.addf %28, %29 : vector<8x128xf32>
    %cst_15 = arith.constant 0.000000e+00 : f32
    %31 = vector.broadcast %cst_15 : f32 to vector<8x128xf32>
    %32 = arith.maximumf %30, %31 : vector<8x128xf32>
    %c0_16 = arith.constant 0 : index
    %c0_17 = arith.constant 0 : index
    %33 = vector.load %arg5[%c0_16, %c0_17] : memref<128x128xf32, #tpu.memory_space<vmem>>, vector<128x128xf32>
    %cst_18 = arith.constant dense<0.000000e+00> : vector<8x128xf32>
    %34 = tpu.matmul %32, %33, %cst_18 {dimension_numbers = #tpu.dot_dimension_numbers<[1], [0], [0], [1], [0, 0, 1, 1], [], []>} : vector<8x128xf32>, vector<128x128xf32>, vector<8x128xf32> -> vector<8x128xf32>
    %c0_19 = arith.constant 0 : index
    %c0_20 = arith.constant 0 : index
    %35 = vector.load %arg6[%c0_19, %c0_20] : memref<1x128xf32, #tpu.memory_space<vmem>>, vector<1x128xf32>
    %36 = vector.broadcast %35 : vector<1x128xf32> to vector<8x128xf32>
    %37 = arith.addf %34, %36 : vector<8x128xf32>
    %cst_21 = arith.constant dense<0.000000e+00> : vector<128xf32>
    %38 = vector.multi_reduction <add>, %37, %cst_21 [0] : vector<8x128xf32> to vector<128xf32>
    %39 = vector.shape_cast %38 : vector<128xf32> to vector<1x128xf32>
    %cst_22 = arith.constant 8.000000e+00 : f32
    %40 = vector.broadcast %cst_22 : f32 to vector<1x128xf32>
    %41 = arith.divf %39, %40 : vector<1x128xf32>
    %42 = arith.mulf %37, %37 : vector<8x128xf32>
    %cst_23 = arith.constant dense<0.000000e+00> : vector<128xf32>
    %43 = vector.multi_reduction <add>, %42, %cst_23 [0] : vector<8x128xf32> to vector<128xf32>
    %44 = vector.shape_cast %43 : vector<128xf32> to vector<1x128xf32>
    %cst_24 = arith.constant 8.000000e+00 : f32
    %45 = vector.broadcast %cst_24 : f32 to vector<1x128xf32>
    %46 = arith.divf %44, %45 : vector<1x128xf32>
    %47 = arith.mulf %41, %41 : vector<1x128xf32>
    %48 = arith.subf %46, %47 : vector<1x128xf32>
    %cst_25 = arith.constant 0.000000e+00 : f32
    %49 = vector.broadcast %cst_25 : f32 to vector<1x128xf32>
    %50 = arith.maximumf %48, %49 : vector<1x128xf32>
    %c0_26 = arith.constant 0 : index
    %c0_27 = arith.constant 0 : index
    %51 = vector.load %arg7[%c0_26, %c0_27] : memref<1x128xf32, #tpu.memory_space<vmem>>, vector<1x128xf32>
    %cst_28 = arith.constant 9.99999974E-6 : f32
    %52 = vector.broadcast %cst_28 : f32 to vector<1x128xf32>
    %53 = arith.addf %50, %52 : vector<1x128xf32>
    %54 = math.rsqrt %53 : vector<1x128xf32>
    %55 = arith.mulf %51, %54 : vector<1x128xf32>
    %c0_29 = arith.constant 0 : index
    %c0_30 = arith.constant 0 : index
    %56 = vector.load %arg8[%c0_29, %c0_30] : memref<1x128xf32, #tpu.memory_space<vmem>>, vector<1x128xf32>
    %57 = arith.mulf %41, %55 : vector<1x128xf32>
    %58 = arith.subf %56, %57 : vector<1x128xf32>
    %59 = vector.broadcast %55 : vector<1x128xf32> to vector<8x128xf32>
    %60 = arith.mulf %37, %59 : vector<8x128xf32>
    %61 = vector.broadcast %58 : vector<1x128xf32> to vector<8x128xf32>
    %62 = arith.addf %60, %61 : vector<8x128xf32>
    %cst_31 = arith.constant 0.000000e+00 : f32
    %63 = vector.broadcast %cst_31 : f32 to vector<8x128xf32>
    %64 = arith.maximumf %62, %63 : vector<8x128xf32>
    %c0_32 = arith.constant 0 : index
    %c0_33 = arith.constant 0 : index
    %65 = vector.load %arg9[%c0_32, %c0_33] : memref<128x128xf32, #tpu.memory_space<vmem>>, vector<128x128xf32>
    %cst_34 = arith.constant dense<0.000000e+00> : vector<8x128xf32>
    %66 = tpu.matmul %64, %65, %cst_34 {dimension_numbers = #tpu.dot_dimension_numbers<[1], [0], [0], [1], [0, 0, 1, 1], [], []>} : vector<8x128xf32>, vector<128x128xf32>, vector<8x128xf32> -> vector<8x128xf32>
    %c0_35 = arith.constant 0 : index
    %c0_36 = arith.constant 0 : index
    %67 = vector.load %arg10[%c0_35, %c0_36] : memref<1x128xf32, #tpu.memory_space<vmem>>, vector<1x128xf32>
    %68 = vector.broadcast %67 : vector<1x128xf32> to vector<8x128xf32>
    %69 = arith.addf %66, %68 : vector<8x128xf32>
    %cst_37 = arith.constant 0.000000e+00 : f32
    %70 = vector.broadcast %cst_37 : f32 to vector<8x128xf32>
    %71 = arith.subf %70, %69 : vector<8x128xf32>
    %72 = math.exp %71 : vector<8x128xf32>
    %cst_38 = arith.constant 1.000000e+00 : f32
    %73 = vector.broadcast %cst_38 : f32 to vector<8x128xf32>
    %74 = arith.addf %73, %72 : vector<8x128xf32>
    %75 = tpu.reciprocal %74 {approx = true} : vector<8x128xf32> -> vector<8x128xf32>
    %cst_39 = arith.constant 0.000000e+00 : f32
    %cst_40 = arith.constant 1.000000e+00 : f32
    %76 = vector.broadcast %cst_39 : f32 to vector<8x128xf32>
    %77 = arith.maximumf %76, %75 : vector<8x128xf32>
    %78 = vector.broadcast %cst_40 : f32 to vector<8x128xf32>
    %79 = arith.minimumf %78, %77 : vector<8x128xf32>
    %c0_41 = arith.constant 0 : index
    %c0_42 = arith.constant 0 : index
    %80 = vector.load %arg11[%c0_41, %c0_42] : memref<8x128xf32, #tpu.memory_space<vmem>>, vector<8x128xf32>
    tpu.vector_store %arg11[%c0_41, %c0_42], %79 {strides = array<i32>} : memref<8x128xf32, #tpu.memory_space<vmem>>, vector<8x128xf32>,
    return
  }
}

</mosaic_0001>

<llo_original>
// kernel: _lambda_.1
$region0: #{_lambda_.1}
  #allocation0 [shape = 'u32[]', space=smem, size = 0x4, offset = 0x4, fixed_abs, tag = 'smem constant byte address 0x4 - core index']
  #allocation1 [shape = 'u32[144,128]{1,0:T(1,128)}', space=vmem, size = 0x12000, scoped, tag = 'internal scratch']
  %s0 = inlined_call_operand.vmem [shape: f32[8,128], index: 0, kind: input, shape index: {}]
  %s1 = inlined_call_operand.hbm [shape: f32[128,128], index: 1, kind: input, shape index: {}]
  %s2 = inlined_call_operand.vmem [shape: f32[1,128], index: 2, kind: input, shape index: {}]
  %s3 = inlined_call_operand.vmem [shape: f32[1,128], index: 3, kind: input, shape index: {}]
  %s4 = inlined_call_operand.vmem [shape: f32[1,128], index: 4, kind: input, shape index: {}]
  %s5 = inlined_call_operand.hbm [shape: f32[128,128], index: 5, kind: input, shape index: {}]
  %s6 = inlined_call_operand.vmem [shape: f32[1,128], index: 6, kind: input, shape index: {}]
  %s7 = inlined_call_operand.vmem [shape: f32[1,128], index: 7, kind: input, shape index: {}]
  %s8 = inlined_call_operand.vmem [shape: f32[1,128], index: 8, kind: input, shape index: {}]
  %s9 = inlined_call_operand.hbm [shape: f32[128,128], index: 9, kind: input, shape index: {}]
  %s10 = inlined_call_operand.vmem [shape: f32[1,128], index: 10, kind: input, shape index: {}]
  %s11 = inlined_call_operand.hbm [shape: f32[8,128], index: 11, kind: output, shape index: {}]
  %s12 = sld [smem:[#allocation0]]
  $region66: #{_lambda_.1} parent=0
    _
  %s14 = ssub.s32 1, %s12
  %s15 = scalar_select 0, %s14, %s12
  $region1: #{_lambda_.1} parent=0
    #allocation2 [shape = 'u8[65536]{0}', space=vmem, size = 0x10000, scoped, tag = 'input window, operand 1, single buffered']
    #allocation3 [shape = 's32[1]{0}', space=sflag, size = 0x4, scoped, tag = 'scoped memory for _lambda_.1']
    #allocation4 [shape = 's32[1]{0}', space=sflag, size = 0x4, scoped, tag = 'scoped memory for _lambda_.1']
    #allocation5 [shape = 'u8[65536]{0}', space=vmem, size = 0x10000, scoped, tag = 'input window, operand 5, single buffered']
    #allocation6 [shape = 's32[1]{0}', space=sflag, size = 0x4, scoped, tag = 'scoped memory for _lambda_.1']
    #allocation7 [shape = 'u8[65536]{0}', space=vmem, size = 0x10000, scoped, tag = 'input window, operand 9, single buffered']
    #allocation8 [shape = 'u8[4096]{0}', space=vmem, size = 0x1000, scoped, tag = 'output window, operand 0, single buffered']
    %16 = vsyncpa [#allocation3], 0
    %17 = vsyncpa [#allocation6], 0
    %18 = vsyncpa [#allocation4], 0
    // Predicated region
    $region2: #{_lambda_.1} parent=1 // pred_check
      _
    $region3: #{_lambda_.1} parent=1 // pred_check_branch
      %20 = sbr.rel (0) target = $region5
    $region4: #{_lambda_.1} parent=1 // pred_region
      _
    $region5: #{_lambda_.1} parent=1 // pred_fallthru
      _
    // Predicated region
    $region6: #{_lambda_.1} parent=1 // pred_check
      _
    $region7: #{_lambda_.1} parent=1 // pred_check_branch
      %22 = sbr.rel (0) target = $region9
    $region8: #{_lambda_.1} parent=1 // pred_region
      %s24 = ssub.s32 2048, 2048
      %25 = vsyncadd [#allocation3], %s24
      %s26 = sshll.u32 [#allocation2], 4
      %s27 = int_to_ptr.vmem [resolvable:$true] %s26
      %32 = dma.hbm_to_vmem [thread:$0]  %s1, 2048, %s27, [#allocation3], 128, 128, 8
    $region9: #{_lambda_.1} parent=1 // pred_fallthru
      _
    // Predicated region
    $region10: #{_lambda_.1} parent=1 // pred_check
      _
    $region11: #{_lambda_.1} parent=1 // pred_check_branch
      %34 = sbr.rel (0) target = $region13
    $region12: #{_lambda_.1} parent=1 // pred_region
      _
    $region13: #{_lambda_.1} parent=1 // pred_fallthru
      _
    // Predicated region
    $region14: #{_lambda_.1} parent=1 // pred_check
      _
    $region15: #{_lambda_.1} parent=1 // pred_check_branch
      %36 = sbr.rel (0) target = $region17
    $region16: #{_lambda_.1} parent=1 // pred_region
      _
    $region17: #{_lambda_.1} parent=1 // pred_fallthru
      _
    // Predicated region
    $region18: #{_lambda_.1} parent=1 // pred_check
      _
    $region19: #{_lambda_.1} parent=1 // pred_check_branch
      %38 = sbr.rel (0) target = $region21
    $region20: #{_lambda_.1} parent=1 // pred_region
      _
    $region21: #{_lambda_.1} parent=1 // pred_fallthru
      _
    // Predicated region
    $region22: #{_lambda_.1} parent=1 // pred_check
      _
    $region23: #{_lambda_.1} parent=1 // pred_check_branch
      %40 = sbr.rel (0) target = $region25
    $region24: #{_lambda_.1} parent=1 // pred_region
      %s42 = ssub.s32 2048, 2048
      %43 = vsyncadd [#allocation6], %s42
      %s44 = sshll.u32 [#allocation5], 4
      %s45 = int_to_ptr.vmem [resolvable:$true] %s44
      %50 = dma.hbm_to_vmem [thread:$0]  %s5, 2048, %s45, [#allocation6], 128, 128, 8
    $region25: #{_lambda_.1} parent=1 // pred_fallthru
      _
    // Predicated region
    $region26: #{_lambda_.1} parent=1 // pred_check
      _
    $region27: #{_lambda_.1} parent=1 // pred_check_branch
      %52 = sbr.rel (0) target = $region29
    $region28: #{_lambda_.1} parent=1 // pred_region
      _
    $region29: #{_lambda_.1} parent=1 // pred_fallthru
      _
    // Predicated region
    $region30: #{_lambda_.1} parent=1 // pred_check
      _
    $region31: #{_lambda_.1} parent=1 // pred_check_branch
      %54 = sbr.rel (0) target = $region33
    $region32: #{_lambda_.1} parent=1 // pred_region
      _
    $region33: #{_lambda_.1} parent=1 // pred_fallthru
      _
    // Predicated region
    $region34: #{_lambda_.1} parent=1 // pred_check
      _
    $region35: #{_lambda_.1} parent=1 // pred_check_branch
      %56 = sbr.rel (0) target = $region37
    $region36: #{_lambda_.1} parent=1 // pred_region
      _
    $region37: #{_lambda_.1} parent=1 // pred_fallthru
      _
    // Predicated region
    $region38: #{_lambda_.1} parent=1 // pred_check
      _
    $region39: #{_lambda_.1} parent=1 // pred_check_branch
      %58 = sbr.rel (0) target = $region41
    $region40: #{_lambda_.1} parent=1 // pred_region
      %s60 = ssub.s32 2048, 2048
      %61 = vsyncadd [#allocation6], %s60
      %s62 = sshll.u32 [#allocation7], 4
      %s63 = int_to_ptr.vmem [resolvable:$true] %s62
      %68 = dma.hbm_to_vmem [thread:$0]  %s9, 2048, %s63, [#allocation6], 128, 128, 8
    $region41: #{_lambda_.1} parent=1 // pred_fallthru
      _
    // Predicated region
    $region42: #{_lambda_.1} parent=1 // pred_check
      _
    $region43: #{_lambda_.1} parent=1 // pred_check_branch
      %70 = sbr.rel (0) target = $region45
    $region44: #{_lambda_.1} parent=1 // pred_region
      _
    $region45: #{_lambda_.1} parent=1 // pred_fallthru
      _
    // Predicated region
    $region46: #{_lambda_.1} parent=1 // pred_check
      _
    $region47: #{_lambda_.1} parent=1 // pred_check_branch
      %72 = sbr.rel (0) target = $region49
    $region48: #{_lambda_.1} parent=1 // pred_region
      %73 = dma.done [#allocation3], 2048
    $region49: #{_lambda_.1} parent=1 // pred_fallthru
      _
    // Predicated region
    $region50: #{_lambda_.1} parent=1 // pred_check
      _
    $region51: #{_lambda_.1} parent=1 // pred_check_branch
      %75 = sbr.rel (0) target = $region53
    $region52: #{_lambda_.1} parent=1 // pred_region
      %76 = dma.done [#allocation6], 2048
    $region53: #{_lambda_.1} parent=1 // pred_fallthru
      _
    // Predicated region
    $region54: #{_lambda_.1} parent=1 // pred_check
      _
    $region55: #{_lambda_.1} parent=1 // pred_check_branch
      %78 = sbr.rel (0) target = $region57
    $region56: #{_lambda_.1} parent=1 // pred_region
      %79 = dma.done [#allocation6], 2048
    $region57: #{_lambda_.1} parent=1 // pred_fallthru
      _
    %v80 = vld [vmem:[%s0] sm:$0xff]
    %v81 = vld [vmem:[#allocation2] sm:$0xff]
    %v82 = vld [vmem:[#allocation2 + $0x8] sm:$0xff]
    %v83 = vld [vmem:[#allocation2 + $0x10] sm:$0xff]
    %v84 = vld [vmem:[#allocation2 + $0x18] sm:$0xff]
    %v85 = vld [vmem:[#allocation2 + $0x20] sm:$0xff]
    %v86 = vld [vmem:[#allocation2 + $0x28] sm:$0xff]
    %v87 = vld [vmem:[#allocation2 + $0x30] sm:$0xff]
    %v88 = vld [vmem:[#allocation2 + $0x38] sm:$0xff]
    %v89 = vld [vmem:[#allocation2 + $0x40] sm:$0xff]
    %v90 = vld [vmem:[#allocation2 + $0x48] sm:$0xff]
    %v91 = vld [vmem:[#allocation2 + $0x50] sm:$0xff]
    %v92 = vld [vmem:[#allocation2 + $0x58] sm:$0xff]
    %v93 = vld [vmem:[#allocation2 + $0x60] sm:$0xff]
    %v94 = vld [vmem:[#allocation2 + $0x68] sm:$0xff]
    %v95 = vld [vmem:[#allocation2 + $0x70] sm:$0xff]
    %v96 = vld [vmem:[#allocation2 + $0x78] sm:$0xff]
    %v97 = vld [vmem:[%s2] sm:$0x1]
    %v99 = vlaneseq
    %v100 = vshrl.u32 %v99, 7
    %v101 = vsub.s32 0, %v100
    %v102 = vrot.slane %v97, %v101
    %104 = vmatprep.subr.mxu0 0.0
    %105 = vmatpush1.msra.mxu0 %v81
    %106 = vmatprep.subr.mxu0 0.0
    %107 = vmatpush1.msra.mxu0 %v82
    %108 = vmatprep.subr.mxu0 0.0
    %109 = vmatpush1.msra.mxu0 %v83
    %110 = vmatprep.subr.mxu0 0.0
    %111 = vmatpush1.msra.mxu0 %v84
    %112 = vmatprep.subr.mxu0 0.0
    %113 = vmatpush1.msra.mxu0 %v85
    %114 = vmatprep.subr.mxu0 0.0
    %115 = vmatpush1.msra.mxu0 %v86
    %116 = vmatprep.subr.mxu0 0.0
    %117 = vmatpush1.msra.mxu0 %v87
    %118 = vmatprep.subr.mxu0 0.0
    %119 = vmatpush1.msra.mxu0 %v88
    %120 = vmatprep.subr.mxu0 0.0
    %121 = vmatpush1.msra.mxu0 %v89
    %122 = vmatprep.subr.mxu0 0.0
    %123 = vmatpush1.msra.mxu0 %v90
    %124 = vmatprep.subr.mxu0 0.0
    %125 = vmatpush1.msra.mxu0 %v91
    %126 = vmatprep.subr.mxu0 0.0
    %127 = vmatpush1.msra.mxu0 %v92
    %128 = vmatprep.subr.mxu0 0.0
    %129 = vmatpush1.msra.mxu0 %v93
    %130 = vmatprep.subr.mxu0 0.0
    %131 = vmatpush1.msra.mxu0 %v94
    %132 = vmatprep.subr.mxu0 0.0
    %133 = vmatpush1.msra.mxu0 %v95
    %134 = vmatprep.subr.mxu0 0.0
    %135 = vmatpush1.msra.mxu0 %v96
    %136 = vmatprep.subr.mxu0 0.0
    %137 = vmatpush1.msra.mxu0 0.0
    %138 = vmatprep.subr.mxu0 0.0
    %139 = vmatpush1.msra.mxu0 0.0
    %140 = vmatprep.subr.mxu0 0.0
    %141 = vmatpush1.msra.mxu0 0.0
    %142 = vmatprep.subr.mxu0 0.0
    %143 = vmatpush1.msra.mxu0 0.0
    %144 = vmatprep.subr.mxu0 0.0
    %145 = vmatpush1.msra.mxu0 0.0
    %146 = vmatprep.subr.mxu0 0.0
    %147 = vmatpush1.msra.mxu0 0.0
    %148 = vmatprep.subr.mxu0 0.0
    %149 = vmatpush1.msra.mxu0 0.0
    %150 = vmatprep.subr.mxu0 0.0
    %151 = vmatpush1.msra.mxu0 0.0
    %152 = vmatprep.subr.mxu0 0.0
    %153 = vmatpush1.msra.mxu0 0.0
    %154 = vmatprep.subr.mxu0 0.0
    %155 = vmatpush1.msra.mxu0 0.0
    %156 = vmatprep.subr.mxu0 0.0
    %157 = vmatpush1.msra.mxu0 0.0
    %158 = vmatprep.subr.mxu0 0.0
    %159 = vmatpush1.msra.mxu0 0.0
    %160 = vmatprep.subr.mxu0 0.0
    %161 = vmatpush1.msra.mxu0 0.0
    %162 = vmatprep.subr.mxu0 0.0
    %163 = vmatpush1.msra.mxu0 0.0
    %164 = vmatprep.subr.mxu0 0.0
    %165 = vmatpush1.msra.mxu0 0.0
    %166 = vmatprep.subr.mxu0 0.0
    %167 = vmatpush1.msra.mxu0 0.0
    %168 = vmatprep.mubr.f32.mxu0 0.0
    %169 = vmatmul.mubr.f32.gmra.mrb[0].mxu0 %v80
    %v170 = vpop.f32.mrb[0].mxu0
    %v171 = vadd.f32 %v102, %v170
    %v172 = vpop.f32.mrb[0].mxu0
    %173 = vdwg.mxu0
    %v174 = vrot.slane %v171, 4
    %v175 = vadd.f32 %v171, %v174
    %v176 = vrot.slane %v175, 2
    %v177 = vadd.f32 %v175, %v176
    %v178 = vrot.slane %v177, 1
    %v179 = vadd.f32 %v177, %v178
    %v180 = vrcp.pop 8.0
    %v181 = vmul.f32 %v179, %v180
    %v182 = vmul.f32 %v171, %v171
    %v183 = vrot.slane %v182, 4
    %v184 = vadd.f32 %v182, %v183
    %v185 = vrot.slane %v184, 2
    %v186 = vadd.f32 %v184, %v185
    %v187 = vrot.slane %v186, 1
    %v188 = vadd.f32 %v186, %v187
    %v189 = vmul.f32 %v188, %v180
    %v190 = vmul.f32 %v181, %v181
    %v191 = vsub.f32 %v189, %v190
    %v192 = vmax.f32 %v191, 0.0
    %v193 = vld [vmem:[%s3] sm:$0x1]
    %v194 = vadd.f32 %v192, 1e-05
    %v195 = vrsqrt.pop %v194
    %v196 = vmul.f32 %v193, %v195
    %v197 = vld [vmem:[%s4] sm:$0x1]
    %v198 = vmul.f32 %v181, %v196
    %v199 = vsub.f32 %v197, %v198
    %v201 = vlaneseq
    %v202 = vshrl.u32 %v201, 7
    %v203 = vsub.s32 0, %v202
    %v204 = vrot.slane %v196, %v203
    %v206 = vmul.f32 %v171, %v204
    %v208 = vlaneseq
    %v209 = vshrl.u32 %v208, 7
    %v210 = vsub.s32 0, %v209
    %v211 = vrot.slane %v199, %v210
    %v213 = vadd.f32 %v206, %v211
    %v214 = vmax.f32 %v213, 0.0
    %v215 = vld [vmem:[#allocation5] sm:$0xff]
    %v216 = vld [vmem:[#allocation5 + $0x8] sm:$0xff]
    %v217 = vld [vmem:[#allocation5 + $0x10] sm:$0xff]
    %v218 = vld [vmem:[#allocation5 + $0x18] sm:$0xff]
    %v219 = vld [vmem:[#allocation5 + $0x20] sm:$0xff]
    %v220 = vld [vmem:[#allocation5 + $0x28] sm:$0xff]
    %v221 = vld [vmem:[#allocation5 + $0x30] sm:$0xff]
    %v222 = vld [vmem:[#allocation5 + $0x38] sm:$0xff]
    %v223 = vld [vmem:[#allocation5 + $0x40] sm:$0xff]
    %v224 = vld [vmem:[#allocation5 + $0x48] sm:$0xff]
    %v225 = vld [vmem:[#allocation5 + $0x50] sm:$0xff]
    %v226 = vld [vmem:[#allocation5 + $0x58] sm:$0xff]
    %v227 = vld [vmem:[#allocation5 + $0x60] sm:$0xff]
    %v228 = vld [vmem:[#allocation5 + $0x68] sm:$0xff]
    %v229 = vld [vmem:[#allocation5 + $0x70] sm:$0xff]
    %v230 = vld [vmem:[#allocation5 + $0x78] sm:$0xff]
    %v231 = vld [vmem:[%s6] sm:$0x1]
    %v233 = vlaneseq
    %v234 = vshrl.u32 %v233, 7
    %v235 = vsub.s32 0, %v234
    %v236 = vrot.slane %v231, %v235
    %238 = vmatprep.subr.mxu0 0.0
    %239 = vmatpush1.msra.mxu0 %v215
    %240 = vmatprep.subr.mxu0 0.0
    %241 = vmatpush1.msra.mxu0 %v216
    %242 = vmatprep.subr.mxu0 0.0
    %243 = vmatpush1.msra.mxu0 %v217
    %244 = vmatprep.subr.mxu0 0.0
    %245 = vmatpush1.msra.mxu0 %v218
    %246 = vmatprep.subr.mxu0 0.0
    %247 = vmatpush1.msra.mxu0 %v219
    %248 = vmatprep.subr.mxu0 0.0
    %249 = vmatpush1.msra.mxu0 %v220
    %250 = vmatprep.subr.mxu0 0.0
    %251 = vmatpush1.msra.mxu0 %v221
    %252 = vmatprep.subr.mxu0 0.0
    %253 = vmatpush1.msra.mxu0 %v222
    %254 = vmatprep.subr.mxu0 0.0
    %255 = vmatpush1.msra.mxu0 %v223
    %256 = vmatprep.subr.mxu0 0.0
    %257 = vmatpush1.msra.mxu0 %v224
    %258 = vmatprep.subr.mxu0 0.0
    %259 = vmatpush1.msra.mxu0 %v225
    %260 = vmatprep.subr.mxu0 0.0
    %261 = vmatpush1.msra.mxu0 %v226
    %262 = vmatprep.subr.mxu0 0.0
    %263 = vmatpush1.msra.mxu0 %v227
    %264 = vmatprep.subr.mxu0 0.0
    %265 = vmatpush1.msra.mxu0 %v228
    %266 = vmatprep.subr.mxu0 0.0
    %267 = vmatpush1.msra.mxu0 %v229
    %268 = vmatprep.subr.mxu0 0.0
    %269 = vmatpush1.msra.mxu0 %v230
    %270 = vmatprep.subr.mxu0 0.0
    %271 = vmatpush1.msra.mxu0 0.0
    %272 = vmatprep.subr.mxu0 0.0
    %273 = vmatpush1.msra.mxu0 0.0
    %274 = vmatprep.subr.mxu0 0.0
    %275 = vmatpush1.msra.mxu0 0.0
    %276 = vmatprep.subr.mxu0 0.0
    %277 = vmatpush1.msra.mxu0 0.0
    %278 = vmatprep.subr.mxu0 0.0
    %279 = vmatpush1.msra.mxu0 0.0
    %280 = vmatprep.subr.mxu0 0.0
    %281 = vmatpush1.msra.mxu0 0.0
    %282 = vmatprep.subr.mxu0 0.0
    %283 = vmatpush1.msra.mxu0 0.0
    %284 = vmatprep.subr.mxu0 0.0
    %285 = vmatpush1.msra.mxu0 0.0
    %286 = vmatprep.subr.mxu0 0.0
    %287 = vmatpush1.msra.mxu0 0.0
    %288 = vmatprep.subr.mxu0 0.0
    %289 = vmatpush1.msra.mxu0 0.0
    %290 = vmatprep.subr.mxu0 0.0
    %291 = vmatpush1.msra.mxu0 0.0
    %292 = vmatprep.subr.mxu0 0.0
    %293 = vmatpush1.msra.mxu0 0.0
    %294 = vmatprep.subr.mxu0 0.0
    %295 = vmatpush1.msra.mxu0 0.0
    %296 = vmatprep.subr.mxu0 0.0
    %297 = vmatpush1.msra.mxu0 0.0
    %298 = vmatprep.subr.mxu0 0.0
    %299 = vmatpush1.msra.mxu0 0.0
    %300 = vmatprep.subr.mxu0 0.0
    %301 = vmatpush1.msra.mxu0 0.0
    %302 = vmatprep.mubr.f32.mxu0 0.0
    %303 = vmatmul.mubr.f32.gmra.mrb[0].mxu0 %v214
    %v304 = vpop.f32.mrb[0].mxu0
    %v305 = vadd.f32 %v236, %v304
    %v306 = vpop.f32.mrb[0].mxu0
    %307 = vdwg.mxu0
    %v308 = vrot.slane %v305, 4
    %v309 = vadd.f32 %v305, %v308
    %v310 = vrot.slane %v309, 2
    %v311 = vadd.f32 %v309, %v310
    %v312 = vrot.slane %v311, 1
    %v313 = vadd.f32 %v311, %v312
    %v314 = vmul.f32 %v313, %v180
    %v315 = vmul.f32 %v305, %v305
    %v316 = vrot.slane %v315, 4
    %v317 = vadd.f32 %v315, %v316
    %v318 = vrot.slane %v317, 2
    %v319 = vadd.f32 %v317, %v318
    %v320 = vrot.slane %v319, 1
    %v321 = vadd.f32 %v319, %v320
    %v322 = vmul.f32 %v321, %v180
    %v323 = vmul.f32 %v314, %v314
    %v324 = vsub.f32 %v322, %v323
    %v325 = vmax.f32 %v324, 0.0
    %v326 = vld [vmem:[%s7] sm:$0x1]
    %v327 = vadd.f32 %v325, 1e-05
    %v328 = vrsqrt.pop %v327
    %v329 = vmul.f32 %v326, %v328
    %v330 = vld [vmem:[%s8] sm:$0x1]
    %v331 = vmul.f32 %v314, %v329
    %v332 = vsub.f32 %v330, %v331
    %v334 = vlaneseq
    %v335 = vshrl.u32 %v334, 7
    %v336 = vsub.s32 0, %v335
    %v337 = vrot.slane %v329, %v336
    %v339 = vmul.f32 %v305, %v337
    %v341 = vlaneseq
    %v342 = vshrl.u32 %v341, 7
    %v343 = vsub.s32 0, %v342
    %v344 = vrot.slane %v332, %v343
    %v346 = vadd.f32 %v339, %v344
    %v347 = vmax.f32 %v346, 0.0
    %v348 = vld [vmem:[#allocation7] sm:$0xff]
    %v349 = vld [vmem:[#allocation7 + $0x8] sm:$0xff]
    %v350 = vld [vmem:[#allocation7 + $0x10] sm:$0xff]
    %v351 = vld [vmem:[#allocation7 + $0x18] sm:$0xff]
    %v352 = vld [vmem:[#allocation7 + $0x20] sm:$0xff]
    %v353 = vld [vmem:[#allocation7 + $0x28] sm:$0xff]
    %v354 = vld [vmem:[#allocation7 + $0x30] sm:$0xff]
    %v355 = vld [vmem:[#allocation7 + $0x38] sm:$0xff]
    %v356 = vld [vmem:[#allocation7 + $0x40] sm:$0xff]
    %v357 = vld [vmem:[#allocation7 + $0x48] sm:$0xff]
    %v358 = vld [vmem:[#allocation7 + $0x50] sm:$0xff]
    %v359 = vld [vmem:[#allocation7 + $0x58] sm:$0xff]
    %v360 = vld [vmem:[#allocation7 + $0x60] sm:$0xff]
    %v361 = vld [vmem:[#allocation7 + $0x68] sm:$0xff]
    %v362 = vld [vmem:[#allocation7 + $0x70] sm:$0xff]
    %v363 = vld [vmem:[#allocation7 + $0x78] sm:$0xff]
    %v364 = vld [vmem:[%s10] sm:$0x1]
    %v366 = vlaneseq
    %v367 = vshrl.u32 %v366, 7
    %v368 = vsub.s32 0, %v367
    %v369 = vrot.slane %v364, %v368
    %371 = vmatprep.subr.mxu0 0.0
    %372 = vmatpush1.msra.mxu0 %v348
    %373 = vmatprep.subr.mxu0 0.0
    %374 = vmatpush1.msra.mxu0 %v349
    %375 = vmatprep.subr.mxu0 0.0
    %376 = vmatpush1.msra.mxu0 %v350
    %377 = vmatprep.subr.mxu0 0.0
    %378 = vmatpush1.msra.mxu0 %v351
    %379 = vmatprep.subr.mxu0 0.0
    %380 = vmatpush1.msra.mxu0 %v352
    %381 = vmatprep.subr.mxu0 0.0
    %382 = vmatpush1.msra.mxu0 %v353
    %383 = vmatprep.subr.mxu0 0.0
    %384 = vmatpush1.msra.mxu0 %v354
    %385 = vmatprep.subr.mxu0 0.0
    %386 = vmatpush1.msra.mxu0 %v355
    %387 = vmatprep.subr.mxu0 0.0
    %388 = vmatpush1.msra.mxu0 %v356
    %389 = vmatprep.subr.mxu0 0.0
    %390 = vmatpush1.msra.mxu0 %v357
    %391 = vmatprep.subr.mxu0 0.0
    %392 = vmatpush1.msra.mxu0 %v358
    %393 = vmatprep.subr.mxu0 0.0
    %394 = vmatpush1.msra.mxu0 %v359
    %395 = vmatprep.subr.mxu0 0.0
    %396 = vmatpush1.msra.mxu0 %v360
    %397 = vmatprep.subr.mxu0 0.0
    %398 = vmatpush1.msra.mxu0 %v361
    %399 = vmatprep.subr.mxu0 0.0
    %400 = vmatpush1.msra.mxu0 %v362
    %401 = vmatprep.subr.mxu0 0.0
    %402 = vmatpush1.msra.mxu0 %v363
    %403 = vmatprep.subr.mxu0 0.0
    %404 = vmatpush1.msra.mxu0 0.0
    %405 = vmatprep.subr.mxu0 0.0
    %406 = vmatpush1.msra.mxu0 0.0
    %407 = vmatprep.subr.mxu0 0.0
    %408 = vmatpush1.msra.mxu0 0.0
    %409 = vmatprep.subr.mxu0 0.0
    %410 = vmatpush1.msra.mxu0 0.0
    %411 = vmatprep.subr.mxu0 0.0
    %412 = vmatpush1.msra.mxu0 0.0
    %413 = vmatprep.subr.mxu0 0.0
    %414 = vmatpush1.msra.mxu0 0.0
    %415 = vmatprep.subr.mxu0 0.0
    %416 = vmatpush1.msra.mxu0 0.0
    %417 = vmatprep.subr.mxu0 0.0
    %418 = vmatpush1.msra.mxu0 0.0
    %419 = vmatprep.subr.mxu0 0.0
    %420 = vmatpush1.msra.mxu0 0.0
    %421 = vmatprep.subr.mxu0 0.0
    %422 = vmatpush1.msra.mxu0 0.0
    %423 = vmatprep.subr.mxu0 0.0
    %424 = vmatpush1.msra.mxu0 0.0
    %425 = vmatprep.subr.mxu0 0.0
    %426 = vmatpush1.msra.mxu0 0.0
    %427 = vmatprep.subr.mxu0 0.0
    %428 = vmatpush1.msra.mxu0 0.0
    %429 = vmatprep.subr.mxu0 0.0
    %430 = vmatpush1.msra.mxu0 0.0
    %431 = vmatprep.subr.mxu0 0.0
    %432 = vmatpush1.msra.mxu0 0.0
    %433 = vmatprep.subr.mxu0 0.0
    %434 = vmatpush1.msra.mxu0 0.0
    %435 = vmatprep.mubr.f32.mxu0 0.0
    %436 = vmatmul.mubr.f32.gmra.mrb[0].mxu0 %v347
    %v437 = vpop.f32.mrb[0].mxu0
    %v438 = vadd.f32 %v369, %v437
    %v439 = vpop.f32.mrb[0].mxu0
    %440 = vdwg.mxu0
    %v441 = vsub.f32 0.0, %v438
    %v442 = vmul.f32 %v441, 1.442695
    %v443 = vpow.pop %v442
    %v444 = vadd.f32 %v443, 1.0
    %v445 = vrcp.pop %v444
    %v446 = vmax.f32 %v445, 0.0
    %v447 = vmin.f32 %v446, 1.0
    %448 = vst [vmem:[#allocation8] sm:$0xff] %v447
    // Predicated region
    $region58: #{_lambda_.1} parent=1 // pred_check
      _
    $region59: #{_lambda_.1} parent=1 // pred_check_branch
      %450 = sbr.rel (0) target = $region61
    $region60: #{_lambda_.1} parent=1 // pred_region
      %s452 = ssub.s32 128, 128
      %453 = vsyncadd [#allocation4], %s452
      %s455 = sshll.u32 [#allocation8], 4
      %s456 = int_to_ptr.vmem [resolvable:$true] %s455
      %458 = dma.vmem_to_hbm [thread:$0]  %s456, 128, %s11, [#allocation4]
    $region61: #{_lambda_.1} parent=1 // pred_fallthru
      _
    // Predicated region
    $region62: #{_lambda_.1} parent=1 // pred_check
      _
    $region63: #{_lambda_.1} parent=1 // pred_check_branch
      %460 = sbr.rel (0) target = $region65
    $region64: #{_lambda_.1} parent=1 // pred_region
      %461 = dma.done [#allocation4], 128
    $region65: #{_lambda_.1} parent=1 // pred_fallthru
      _
    %462 = vsyncpa [#allocation3], 1
    %463 = vsyncpa [#allocation6], 1
    %464 = vsyncpa [#allocation4], 1

</llo_original>
